<compile_context>
chip_gen: v7x
topology: tpu7x:2x2x1
jax: 0.10.0
libtpu: 0.0.40
codegen_flags: <defaults>
</compile_context>

<pallas_src>
import functools

import jax
import jax.numpy as jnp
from jax import lax
from jax.experimental import pallas as pl
from jax.experimental.pallas import tpu as pltpu


_VMEM_LIMIT = 32 * 1024 * 1024   # explicit: v5e defaults to only 16 MiB scoped VMEM


def _round_up(x, m):
    return (x + m - 1) // m * m


def _pad_rows(x, rows):
    if x.shape[0] == rows:
        return x
    return jnp.zeros((rows,) + x.shape[1:], x.dtype).at[:x.shape[0]].set(x)


def _pad_2d(x, rows, cols):
    if x.shape == (rows, cols):
        return x
    return jnp.zeros((rows, cols), x.dtype).at[:x.shape[0], :x.shape[1]].set(x)


# ----------------------------------------------------------------------------
# Kernels
# ----------------------------------------------------------------------------
def _support_kernel(feat_ref, w_ref, sup_ref, *, active):
    s = jnp.dot(feat_ref[...], w_ref[...], preferred_element_type=jnp.float32)
    if active:
        s = jnp.tanh(s)
    sup_ref[...] = s.astype(sup_ref.dtype)


def _aggregate_kernel(adj_ref, sup_ref, out_ref, acc_ref):
    # output[i] = sum_k adj[i, k] @ support[k]  -- K-blocked with f32 accumulator.
    @pl.when(pl.program_id(1) == 0)
    def _():
        acc_ref[...] = jnp.zeros_like(acc_ref)

    acc_ref[...] += jnp.dot(adj_ref[...], sup_ref[...],
                            preferred_element_type=jnp.float32)

    @pl.when(pl.program_id(1) == pl.num_programs(1) - 1)
    def _():
        out_ref[...] = acc_ref[...].astype(out_ref.dtype)


def _attention_kernel(outi_ref, outj_ref, att_ref):
    # logits = out_i @ out_j^T without materializing the transpose:
    # contract dim 1 of lhs against dim 1 of rhs directly on the MXU.
    logits = lax.dot_general(outi_ref[...], outj_ref[...],
                             dimension_numbers=(((1,), (1,)), ((), ())),
                             preferred_element_type=jnp.float32)
    # sigmoid(x) == 0.5 * (tanh(x / 2) + 1): a single EUP transcendental/elem.
    att_ref[...] = (0.5 * (jnp.tanh(0.5 * logits) + 1.0)).astype(att_ref.dtype)


# ----------------------------------------------------------------------------
# Wrapper
# ----------------------------------------------------------------------------
def gnn_layer(features, adj, weight, *, att=False, active=False,
              stream_bf16=False):
    N, f_in = features.shape
    f_in_w, f_out = weight.shape
    assert f_in == f_in_w and adj.shape == (N, N)

    # -------- tile selection --------------------------------------------------
    if N > 512:
        tn = 512                          # row tile (phases 1-3)
        tk = 512                          # reduction tile (phase 2)
        n_pad = _round_up(N, 512)
    else:
        n_pad = _round_up(N, 16) if N > 8 else _round_up(max(N, 1), 8)
        # Split the row axis into >= 2 tiles so both v7x TensorCores get work
        # on the "parallel" grid axes (no effect on single-TC v5e/v6e).
        tn = n_pad // 2 if (n_pad >= 16 and (n_pad // 2) % 8 == 0) else n_pad
        tk = n_pad                        # everything fits: single K block
    n_row = n_pad // tn
    n_k = n_pad // tk
    ti = tn                               # attention row tile
    tj = min(n_pad, 512)                  # attention col tile (lane-dense)
    n_i, n_j = n_pad // ti, n_pad // tj

    stream_dtype = jnp.bfloat16 if stream_bf16 else jnp.float32
    esz = 2 if stream_bf16 else 4

    feats = _pad_rows(features.astype(jnp.float32), n_pad)
    w = weight.astype(jnp.float32)
    adj_p = _pad_2d(adj.astype(jnp.float32), n_pad, n_pad).astype(stream_dtype)

    # ---- phase 1: support = [tanh](features @ W), tiled over node rows -------
    support = pl.pallas_call(
        functools.partial(_support_kernel, active=active),
        out_shape=jax.ShapeDtypeStruct((n_pad, f_out), stream_dtype),
        grid=(n_row,),
        in_specs=[pl.BlockSpec((tn, f_in), lambda i: (i, 0)),
                  pl.BlockSpec((f_in, f_out), lambda i: (0, 0))],
        out_specs=pl.BlockSpec((tn, f_out), lambda i: (i, 0)),
        compiler_params=pltpu.CompilerParams(
            dimension_semantics=("parallel",),
            vmem_limit_bytes=_VMEM_LIMIT),
        cost_estimate=pl.CostEstimate(
            flops=2 * n_pad * f_in * f_out,
            transcendentals=(n_pad * f_out) if active else 0,
            bytes_accessed=4 * (n_pad * f_in + f_in * f_out)
                           + esz * n_pad * f_out),
    )(feats, w)

    # ---- phase 2: output = adj @ support, K-blocked with accumulator ---------
    out_p = pl.pallas_call(
        _aggregate_kernel,
        out_shape=jax.ShapeDtypeStruct((n_pad, f_out), jnp.float32),
        grid=(n_row, n_k),
        in_specs=[pl.BlockSpec((tn, tk), lambda i, k: (i, k)),
                  pl.BlockSpec((tk, f_out), lambda i, k: (k, 0))],
        out_specs=pl.BlockSpec((tn, f_out), lambda i, k: (i, 0)),
        scratch_shapes=[pltpu.VMEM((tn, f_out), jnp.float32)],
        compiler_params=pltpu.CompilerParams(
            dimension_semantics=("parallel", "arbitrary"),
            vmem_limit_bytes=_VMEM_LIMIT),
        cost_estimate=pl.CostEstimate(
            flops=2 * n_pad * n_pad * f_out,
            transcendentals=0,
            bytes_accessed=(esz * n_pad * n_pad               # adj streamed once
                            + esz * n_row * n_pad * f_out     # support per row tile
                            + 4 * n_pad * f_out)),            # output written once
    )(adj_p, support)

    output = out_p[:N]
    if not att:
        return output

    # ---- phase 3: a = sigmoid(output @ output^T), tiled on both axes ---------
    out_stream = out_p.astype(stream_dtype) if stream_bf16 else out_p
    a_p = pl.pallas_call(
        _attention_kernel,
        out_shape=jax.ShapeDtypeStruct((n_pad, n_pad), jnp.float32),
        grid=(n_i, n_j),
        in_specs=[pl.BlockSpec((ti, f_out), lambda i, j: (i, 0)),
                  pl.BlockSpec((tj, f_out), lambda i, j: (j, 0))],
        out_specs=pl.BlockSpec((ti, tj), lambda i, j: (i, j)),
        compiler_params=pltpu.CompilerParams(
            dimension_semantics=("parallel", "parallel"),
            vmem_limit_bytes=_VMEM_LIMIT),
        cost_estimate=pl.CostEstimate(
            flops=2 * n_pad * n_pad * f_out,
            transcendentals=n_pad * n_pad,                    # one tanh per element
            bytes_accessed=(esz * n_pad * f_out               # i operand
                            + esz * n_i * n_pad * f_out       # j operand re-streamed
                            + 4 * n_pad * n_pad)),            # attention output
    )(out_stream, out_stream)

    return output, a_p[:N, :N]


# ----------------------------------------------------------------------------
# Parameter init (deterministic, xavier_uniform like torch.nn.init) & reference
# ----------------------------------------------------------------------------
def xavier_uniform(key, fan_in, fan_out, dtype=jnp.float32):
    limit = (6.0 / (fan_in + fan_out)) ** 0.5
    return jax.random.uniform(key, (fan_in, fan_out), dtype,
                              minval=-limit, maxval=limit)


def reference(features, adj, weight, *, att=False, active=False):
    support = features @ weight
    if active:
        support = jnp.tanh(support)
    output = adj @ support
    if att:
        return output, jax.nn.sigmoid(output @ output.T)
    return output


if __name__ == "__main__":
    key = jax.random.PRNGKey(0)
    k_feat, k_adj, k_w = jax.random.split(key, 3)

    N, in_features, out_features = 64, 32, 32

    features = jax.random.normal(k_feat, (N, in_features), jnp.float32)

    # deterministic "sparse" adjacency: random mask + self loops, row-normalized
    mask = (jax.random.uniform(k_adj, (N, N)) < 0.1).astype(jnp.float32)
    adj = mask + jnp.eye(N, dtype=jnp.float32)
    adj = adj / jnp.sum(adj, axis=1, keepdims=True)

    weight = xavier_uniform(k_w, in_features, out_features)

    gnn = jax.jit(gnn_layer, static_argnames=("att", "active", "stream_bf16"))

    # att=True, active=True exercises the full forward path
    out, a = jax.block_until_ready(gnn(features, adj, weight, att=True, active=True))
    ref_out, ref_a = reference(features, adj, weight, att=True, active=True)
    assert jnp.allclose(out, ref_out, atol=2e-5, rtol=2e-5), "output mismatch"
    assert jnp.allclose(a, ref_a, atol=2e-5, rtol=2e-5), "attention mismatch"

    # plain path (att=False, active=False)
    out2 = jax.block_until_ready(gnn(features, adj, weight))
    assert jnp.allclose(out2, reference(features, adj, weight),
                        atol=2e-5, rtol=2e-5), "plain-path mismatch"

    # bf16-streamed variant of the O(N^2) operands (looser tolerance by design)
    out3, a3 = jax.block_until_ready(
        gnn(features, adj, weight, att=True, active=True, stream_bf16=True))
    assert jnp.allclose(out3, ref_out, atol=5e-2, rtol=5e-2), "bf16 output mismatch"
    assert jnp.allclose(a3, ref_a, atol=5e-2, rtol=5e-2), "bf16 attention mismatch"

    print("KERNEL_OK")
</pallas_src>

<mosaic_0001>
module attributes {stable_mosaic.version = 11 : i64} {
  func.func @_support_kernel(%arg0: i32, %arg1: memref<32x32xf32, #tpu.memory_space<vmem>>, %arg2: memref<32x32xf32, #tpu.memory_space<vmem>>, %arg3: memref<32x32xf32, #tpu.memory_space<vmem>>) attributes {dimension_semantics = [#tpu.dimension_semantics<parallel>], iteration_bounds = array<i64: 2>, scalar_prefetch = 0 : i64, scratch_operands = 0 : i64, tpu.core_type = #tpu.core_type<tc>, window_params = [{transform_indices = @transform_0, window_bounds = array<i64: 32, 32>}, {pipeline_mode = #tpu.pipeline_mode<synchronous>, transform_indices = @transform_1, window_bounds = array<i64: 32, 32>}, {transform_indices = @transform_2, window_bounds = array<i64: 32, 32>}]} {
    %c0 = arith.constant 0 : index
    %c0_0 = arith.constant 0 : index
    %0 = vector.load %arg1[%c0, %c0_0] : memref<32x32xf32, #tpu.memory_space<vmem>>, vector<32x32xf32>
    %c0_1 = arith.constant 0 : index
    %c0_2 = arith.constant 0 : index
    %1 = vector.load %arg2[%c0_1, %c0_2] : memref<32x32xf32, #tpu.memory_space<vmem>>, vector<32x32xf32>
    %cst = arith.constant dense<0.000000e+00> : vector<32x32xf32>
    %2 = tpu.matmul %0, %1, %cst {dimension_numbers = #tpu.dot_dimension_numbers<[1], [0], [0], [1], [0, 0, 1, 1], [], []>} : vector<32x32xf32>, vector<32x32xf32>, vector<32x32xf32> -> vector<32x32xf32>
    %3 = math.tanh %2 : vector<32x32xf32>
    %c0_3 = arith.constant 0 : index
    %c0_4 = arith.constant 0 : index
    %4 = vector.load %arg3[%c0_3, %c0_4] : memref<32x32xf32, #tpu.memory_space<vmem>>, vector<32x32xf32>
    tpu.vector_store %arg3[%c0_3, %c0_4], %3 {strides = array<i32>} : memref<32x32xf32, #tpu.memory_space<vmem>>, vector<32x32xf32>,
    return
  }
  func.func @transform_0(%arg0: i32) -> (i32, i32) {
    %c0_i32 = arith.constant 0 : i32
    %c0_i32_0 = arith.constant 0 : i32
    return %arg0, %c0_i32 : i32, i32
  }
  func.func @transform_1(%arg0: i32) -> (i32, i32) {
    %c0_i32 = arith.constant 0 : i32
    %c0_i32_0 = arith.constant 0 : i32
    %c0_i32_1 = arith.constant 0 : i32
    return %c0_i32, %c0_i32_0 : i32, i32
  }
  func.func @transform_2(%arg0: i32) -> (i32, i32) {
    %c0_i32 = arith.constant 0 : i32
    %c0_i32_0 = arith.constant 0 : i32
    return %arg0, %c0_i32 : i32, i32
  }
}

module attributes {stable_mosaic.version = 11 : i64} {
  func.func @_aggregate_kernel(%arg0: i32, %arg1: i32, %arg2: memref<32x64xf32, #tpu.memory_space<vmem>>, %arg3: memref<64x32xf32, #tpu.memory_space<vmem>>, %arg4: memref<32x32xf32, #tpu.memory_space<vmem>>, %arg5: memref<32x32xf32, #tpu.memory_space<vmem>>) attributes {dimension_semantics = [#tpu.dimension_semantics<parallel>, #tpu.dimension_semantics<arbitrary>], iteration_bounds = array<i64: 2, 1>, scalar_prefetch = 0 : i64, scratch_operands = 1 : i64, tpu.core_type = #tpu.core_type<tc>, window_params = [{transform_indices = @transform_0, window_bounds = array<i64: 32, 64>}, {transform_indices = @transform_1, window_bounds = array<i64: 64, 32>}, {transform_indices = @transform_2, window_bounds = array<i64: 32, 32>}]} {
    %c0_i32 = arith.constant 0 : i32
    %0 = arith.cmpi eq, %arg1, %c0_i32 : i32
    %1 = arith.extui %0 : i1 to i32
    %c0_i32_0 = arith.constant 0 : i32
    %2 = arith.cmpi ne, %1, %c0_i32_0 : i32
    scf.if %2 {
      %cst_10 = arith.constant 0.000000e+00 : f32
      %12 = vector.broadcast %cst_10 : f32 to vector<32x32xf32>
      %c0_11 = arith.constant 0 : index
      %c0_12 = arith.constant 0 : index
      %13 = vector.load %arg5[%c0_11, %c0_12] : memref<32x32xf32, #tpu.memory_space<vmem>>, vector<32x32xf32>
      tpu.vector_store %arg5[%c0_11, %c0_12], %12 {strides = array<i32>} : memref<32x32xf32, #tpu.memory_space<vmem>>, vector<32x32xf32>,
    } else {
    }
    %c0 = arith.constant 0 : index
    %c0_1 = arith.constant 0 : index
    %3 = vector.load %arg5[%c0, %c0_1] : memref<32x32xf32, #tpu.memory_space<vmem>>, vector<32x32xf32>
    %c0_2 = arith.constant 0 : index
    %c0_3 = arith.constant 0 : index
    %4 = vector.load %arg2[%c0_2, %c0_3] : memref<32x64xf32, #tpu.memory_space<vmem>>, vector<32x64xf32>
    %c0_4 = arith.constant 0 : index
    %c0_5 = arith.constant 0 : index
    %5 = vector.load %arg3[%c0_4, %c0_5] : memref<64x32xf32, #tpu.memory_space<vmem>>, vector<64x32xf32>
    %cst = arith.constant dense<0.000000e+00> : vector<32x32xf32>
    %6 = tpu.matmul %4, %5, %cst {dimension_numbers = #tpu.dot_dimension_numbers<[1], [0], [0], [1], [0, 0, 1, 1], [], []>} : vector<32x64xf32>, vector<64x32xf32>, vector<32x32xf32> -> vector<32x32xf32>
    %7 = arith.addf %3, %6 : vector<32x32xf32>
    %c0_6 = arith.constant 0 : index
    %c0_7 = arith.constant 0 : index
    %8 = vector.load %arg5[%c0_6, %c0_7] : memref<32x32xf32, #tpu.memory_space<vmem>>, vector<32x32xf32>
    tpu.vector_store %arg5[%c0_6, %c0_7], %7 {strides = array<i32>} : memref<32x32xf32, #tpu.memory_space<vmem>>, vector<32x32xf32>,
    %c0_i32_8 = arith.constant 0 : i32
    %9 = arith.cmpi eq, %arg1, %c0_i32_8 : i32
    %10 = arith.extui %9 : i1 to i32
    %c0_i32_9 = arith.constant 0 : i32
    %11 = arith.cmpi ne, %10, %c0_i32_9 : i32
    scf.if %11 {
      %c0_10 = arith.constant 0 : index
      %c0_11 = arith.constant 0 : index
      %12 = vector.load %arg5[%c0_10, %c0_11] : memref<32x32xf32, #tpu.memory_space<vmem>>, vector<32x32xf32>
      %c0_12 = arith.constant 0 : index
      %c0_13 = arith.constant 0 : index
      %13 = vector.load %arg4[%c0_12, %c0_13] : memref<32x32xf32, #tpu.memory_space<vmem>>, vector<32x32xf32>
      tpu.vector_store %arg4[%c0_12, %c0_13], %12 {strides = array<i32>} : memref<32x32xf32, #tpu.memory_space<vmem>>, vector<32x32xf32>,
    } else {
    }
    return
  }
  func.func @transform_0(%arg0: i32, %arg1: i32) -> (i32, i32) {
    %c0_i32 = arith.constant 0 : i32
    return %arg0, %arg1 : i32, i32
  }
  func.func @transform_1(%arg0: i32, %arg1: i32) -> (i32, i32) {
    %c0_i32 = arith.constant 0 : i32
    %c0_i32_0 = arith.constant 0 : i32
    return %arg1, %c0_i32 : i32, i32
  }
  func.func @transform_2(%arg0: i32, %arg1: i32) -> (i32, i32) {
    %c0_i32 = arith.constant 0 : i32
    %c0_i32_0 = arith.constant 0 : i32
    return %arg0, %c0_i32 : i32, i32
  }
}

module attributes {stable_mosaic.version = 11 : i64} {
  func.func @_attention_kernel(%arg0: i32, %arg1: i32, %arg2: memref<32x32xf32, #tpu.memory_space<vmem>>, %arg3: memref<64x32xf32, #tpu.memory_space<vmem>>, %arg4: memref<32x64xf32, #tpu.memory_space<vmem>>) attributes {dimension_semantics = [#tpu.dimension_semantics<parallel>, #tpu.dimension_semantics<parallel>], iteration_bounds = array<i64: 2, 1>, scalar_prefetch = 0 : i64, scratch_operands = 0 : i64, tpu.core_type = #tpu.core_type<tc>, window_params = [{transform_indices = @transform_0, window_bounds = array<i64: 32, 32>}, {transform_indices = @transform_1, window_bounds = array<i64: 64, 32>}, {transform_indices = @transform_2, window_bounds = array<i64: 32, 64>}]} {
    %c0 = arith.constant 0 : index
    %c0_0 = arith.constant 0 : index
    %0 = vector.load %arg2[%c0, %c0_0] : memref<32x32xf32, #tpu.memory_space<vmem>>, vector<32x32xf32>
    %c0_1 = arith.constant 0 : index
    %c0_2 = arith.constant 0 : index
    %1 = vector.load %arg3[%c0_1, %c0_2] : memref<64x32xf32, #tpu.memory_space<vmem>>, vector<64x32xf32>
    %cst = arith.constant dense<0.000000e+00> : vector<32x64xf32>
    %2 = tpu.matmul %0, %1, %cst {dimension_numbers = #tpu.dot_dimension_numbers<[1], [1], [0], [0], [0, 0, 1, 0], [], []>} : vector<32x32xf32>, vector<64x32xf32>, vector<32x64xf32> -> vector<32x64xf32>
    %cst_3 = arith.constant 5.000000e-01 : f32
    %3 = vector.broadcast %cst_3 : f32 to vector<32x64xf32>
    %4 = arith.mulf %3, %2 : vector<32x64xf32>
    %5 = math.tanh %4 : vector<32x64xf32>
    %cst_4 = arith.constant 1.000000e+00 : f32
    %6 = vector.broadcast %cst_4 : f32 to vector<32x64xf32>
    %7 = arith.addf %5, %6 : vector<32x64xf32>
    %cst_5 = arith.constant 5.000000e-01 : f32
    %8 = vector.broadcast %cst_5 : f32 to vector<32x64xf32>
    %9 = arith.mulf %8, %7 : vector<32x64xf32>
    %c0_6 = arith.constant 0 : index
    %c0_7 = arith.constant 0 : index
    %10 = vector.load %arg4[%c0_6, %c0_7] : memref<32x64xf32, #tpu.memory_space<vmem>>, vector<32x64xf32>
    tpu.vector_store %arg4[%c0_6, %c0_7], %9 {strides = array<i32>} : memref<32x64xf32, #tpu.memory_space<vmem>>, vector<32x64xf32>,
    return
  }
  func.func @transform_0(%arg0: i32, %arg1: i32) -> (i32, i32) {
    %c0_i32 = arith.constant 0 : i32
    %c0_i32_0 = arith.constant 0 : i32
    return %arg0, %c0_i32 : i32, i32
  }
  func.func @transform_1(%arg0: i32, %arg1: i32) -> (i32, i32) {
    %c0_i32 = arith.constant 0 : i32
    %c0_i32_0 = arith.constant 0 : i32
    return %arg1, %c0_i32 : i32, i32
  }
  func.func @transform_2(%arg0: i32, %arg1: i32) -> (i32, i32) {
    %c0_i32 = arith.constant 0 : i32
    return %arg0, %arg1 : i32, i32
  }
}

</mosaic_0001>

<llo_original>
// kernel: gnn_layer.4
$region0: #{gnn_layer.4}
  #allocation0 [shape = 'u32[]', space=smem, size = 0x4, offset = 0x4, fixed_abs, tag = 'smem constant byte address 0x4 - core index']
  #allocation1 [shape = 'u32[144,128]{1,0:T(1,128)}', space=vmem, size = 0x12000, scoped, tag = 'internal scratch']
  #allocation2 [shape = 'f32[32,32]{1,0:T(8,128)}', space=vmem, size = 0x4000, scoped, tag = 'scratch operand']
  %s0 = inlined_call_operand.vmem [shape: f32[64,64], index: 0, kind: input, shape index: {}]
  %s1 = inlined_call_operand.vmem [shape: f32[64,32], index: 1, kind: input, shape index: {}]
  %s2 = inlined_call_operand.vmem [shape: f32[64,32], index: 2, kind: output, shape index: {}]
  %s3 = sld [smem:[#allocation0]]
  $region49: #{gnn_layer.4} parent=0
    _
  %s5 = ssub.s32 1, %s3
  %s6 = scalar_select 0, %s5, %s3
  loop: start=0, step=1, limit=4
  $region2: #{gnn_layer.4} parent=0 // loop_pre_header
    _
  $region3: #{gnn_layer.4} parent=0 // loop_header
    %s8 = sphi 0, %s12
    %p9 = scmp.ge.s32.totalorder %s8, 4
    %s15 = sphi 0, %s27
    %s16 = sphi 0, %s23
    %s17 = sphi 0, %s15
    %s18 = sphi 0, %s16
    %s19 = sphi 0, %s17
    %s20 = sphi 0, %s18
    %s32 = sphi 0, %s34
    %s35 = sphi 0, %s32
    %s36 = sphi 0, %s35
    %s52 = sphi 0, %s36
    %s58 = sphi 0, %s60
    %s61 = sphi 0, %s58
    %s62 = sphi 0, %s61
    %s78 = sphi 0, %s62
    %s84 = sphi 0, %s86
    %s87 = sphi 0, %s84
    %s88 = sphi 0, %s87
    %s104 = sphi 0, %s88
  $region4: #{gnn_layer.4} parent=0 // loop_header_branch
    %11 = sbr.rel (%p9) target = $region8
  $region5: #{gnn_layer.4} parent=0 // loop_body
    %s13 = ssub.s32 %s8, 1
    %s14 = ssub.s32 %s8, 2
    %s21 = sadd.s32 1, %s16
    %p22 = scmp.ge.s32.totalorder %s21, 1
    %s23 = scalar_select %p22, 0, %s21
    %s24 = sadd.s32 1, %s15
    %s25 = scalar_select %p22, %s24, %s15
    %p26 = scmp.ge.s32.totalorder %s25, 2
    %s27 = scalar_select %p26, 0, %s25
    %s28 = ssub.s32 %s15, %s27
    %s29 = ssub.s32 %s16, %s23
    %s30 = sor.u32 %s28, %s29
    %p31 = scmp.eq.s32.totalorder %s30, 0
    %s33 = sadd.s32 %s32, 1
    %s34 = scalar_select %p31, %s32, %s33
    %p37 = pneg %p31
    %p38 = scmp.eq.s32.totalorder %s8, 1
    %p39 = por %p37, %p38
    %p40 = scmp.ne.s32.totalorder %s32, %s35
    %p41 = scmp.eq.s32.totalorder %s8, 0
    %p42 = por %p40, %p41
    %p43 = scmp.ne.s32.totalorder %s32, %s35
    %p44 = scmp.eq.s32.totalorder %s13, 1
    %p45 = por %p43, %p44
    %p46 = scmp.ne.s32.totalorder %s35, %s36
    %p47 = scmp.eq.s32.totalorder %s13, 0
    %p48 = por %p46, %p47
    %p49 = scmp.ne.s32.totalorder %s35, %s36
    %p50 = scmp.eq.s32.totalorder %s14, 1
    %p51 = por %p49, %p50
    %p53 = scmp.ne.s32.totalorder %s36, %s52
    %p54 = scmp.eq.s32.totalorder %s14, 0
    %p55 = por %p53, %p54
    %s56 = ssub.s32 %s16, %s23
    %p57 = scmp.eq.s32.totalorder %s56, 0
    %s59 = sadd.s32 %s58, 1
    %s60 = scalar_select %p57, %s58, %s59
    %p63 = pneg %p57
    %p64 = scmp.eq.s32.totalorder %s8, 1
    %p65 = por %p63, %p64
    %p66 = scmp.ne.s32.totalorder %s58, %s61
    %p67 = scmp.eq.s32.totalorder %s8, 0
    %p68 = por %p66, %p67
    %p69 = scmp.ne.s32.totalorder %s58, %s61
    %p70 = scmp.eq.s32.totalorder %s13, 1
    %p71 = por %p69, %p70
    %p72 = scmp.ne.s32.totalorder %s61, %s62
    %p73 = scmp.eq.s32.totalorder %s13, 0
    %p74 = por %p72, %p73
    %p75 = scmp.ne.s32.totalorder %s61, %s62
    %p76 = scmp.eq.s32.totalorder %s14, 1
    %p77 = por %p75, %p76
    %p79 = scmp.ne.s32.totalorder %s62, %s78
    %p80 = scmp.eq.s32.totalorder %s14, 0
    %p81 = por %p79, %p80
    %s82 = ssub.s32 %s15, %s27
    %p83 = scmp.eq.s32.totalorder %s82, 0
    %s85 = sadd.s32 %s84, 1
    %s86 = scalar_select %p83, %s84, %s85
    %p89 = pneg %p83
    %p90 = scmp.eq.s32.totalorder %s8, 1
    %p91 = por %p89, %p90
    %p92 = scmp.ne.s32.totalorder %s84, %s87
    %p93 = scmp.eq.s32.totalorder %s8, 0
    %p94 = por %p92, %p93
    %p95 = scmp.ne.s32.totalorder %s84, %s87
    %p96 = scmp.eq.s32.totalorder %s13, 1
    %p97 = por %p95, %p96
    %p98 = scmp.ne.s32.totalorder %s87, %s88
    %p99 = scmp.eq.s32.totalorder %s13, 0
    %p100 = por %p98, %p99
    %p101 = scmp.ne.s32.totalorder %s87, %s88
    %p102 = scmp.eq.s32.totalorder %s14, 1
    %p103 = por %p101, %p102
    %p105 = scmp.ne.s32.totalorder %s88, %s104
    %p106 = scmp.eq.s32.totalorder %s14, 0
    %p107 = por %p105, %p106
    %p108 = scmp.le.s32.totalorder 1, %s8
    %p109 = scmp.lt.s32.totalorder %s8, 3
    %p110 = pnand %p108, %p109
    %p111 = pneg %p110
    // Predicated region
    $region9: #{gnn_layer.4} parent=5 // pred_check
      _
    $region10: #{gnn_layer.4} parent=5 // pred_check_branch
      %113 = sbr.rel (%p110) target = $region12
    $region11: #{gnn_layer.4} parent=5 // pred_region
      %s114 = ssub.s32 %s8, 1
      // Predicated region
      $region13: #{gnn_layer.4} parent=11 // pred_check
        %p115 = pneg %p74
      $region14: #{gnn_layer.4} parent=11 // pred_check_branch
        %117 = sbr.rel (%p115) target = $region16
      $region15: #{gnn_layer.4} parent=11 // pred_region
        %s118 = smul.u32 8, %s18
        %p119 = scmp.lt.s32.totalorder %s118, 7
        %s120 = scalar_select %p119, %s118, 7
        %s121 = smul.addr %s120, 8
        %s122 = scalar_lea.vmem %s1, %s121
        %s123 = smul.u32 8, %s18
      $region16: #{gnn_layer.4} parent=11 // pred_fallthru
        _
    $region12: #{gnn_layer.4} parent=5 // pred_fallthru
      _
    %p124 = scmp.lt.s32.totalorder %s8, 2
    // Predicated region
    $region17: #{gnn_layer.4} parent=5 // pred_check
      %p125 = pneg %p124
    $region18: #{gnn_layer.4} parent=5 // pred_check_branch
      %127 = sbr.rel (%p125) target = $region20
    $region19: #{gnn_layer.4} parent=5 // pred_region
      // Predicated region
      $region21: #{gnn_layer.4} parent=19 // pred_check
        %p128 = pneg %p42
      $region22: #{gnn_layer.4} parent=19 // pred_check_branch
        %130 = sbr.rel (%p128) target = $region24
      $region23: #{gnn_layer.4} parent=19 // pred_region
        %s131 = smul.u32 4, %s15
        %p132 = scmp.lt.s32.totalorder %s131, 7
        %s133 = scalar_select %p132, %s131, 7
        %p134 = scmp.lt.s32.totalorder %s16, 0
        %s135 = scalar_select %p134, %s16, 0
        %s136 = sadd.s32 %s135, %s133
        %s137 = smul.addr %s136, 8
        %s138 = scalar_lea.vmem %s0, %s137
        %s139 = smul.u32 4, %s15
      $region24: #{gnn_layer.4} parent=19 // pred_fallthru
        _
    $region20: #{gnn_layer.4} parent=5 // pred_fallthru
      _
    %p140 = scmp.le.s32.totalorder 1, %s8
    %p141 = scmp.lt.s32.totalorder %s8, 3
    %p142 = pnand %p140, %p141
    %p143 = pneg %p142
    // Predicated region
    $region25: #{gnn_layer.4} parent=5 // pred_check
      _
    $region26: #{gnn_layer.4} parent=5 // pred_check_branch
      %145 = sbr.rel (%p142) target = $region28
    $region27: #{gnn_layer.4} parent=5 // pred_region
      %s146 = ssub.s32 %s8, 1
      %s147 = smul.u32 4, %s17
      %p148 = scmp.lt.s32.totalorder %s147, 7
      %s149 = scalar_select %p148, %s147, 7
      %p150 = scmp.lt.s32.totalorder %s18, 0
      %s151 = scalar_select %p150, %s18, 0
      %s152 = sadd.s32 %s151, %s149
      %s153 = smul.addr %s152, 8
      %s154 = scalar_lea.vmem %s0, %s153
      %p155 = pneg %p48
      %p156 = pneg %p45
      %s157 = smul.u32 8, %s18
      %p158 = scmp.lt.s32.totalorder %s157, 7
      %s159 = scalar_select %p158, %s157, 7
      %s160 = smul.addr %s159, 8
      %s161 = scalar_lea.vmem %s1, %s160
      %p162 = pneg %p74
      %p163 = pneg %p71
      %p164 = pneg %p100
      %p165 = pneg %p97
      %s166 = smul.u32 4, %s17
      %p167 = scmp.lt.s32.totalorder %s166, 7
      %s168 = scalar_select %p167, %s166, 7
      %s169 = smul.addr %s168, 8
      %s170 = scalar_lea.vmem %s2, %s169
      %s171 = smul.u32 4, %s17
      %p172 = scmp.lt.s32.totalorder %s171, 7
      %s173 = scalar_select %p172, %s171, 7
      %p174 = scmp.lt.s32.totalorder %s18, 0
      %s175 = scalar_select %p174, %s18, 0
      %s176 = sadd.s32 %s175, %s173
      %s177 = smul.addr %s176, 8
      %s178 = scalar_lea.vmem %s0, %s177
      %s179 = smul.u32 4, %s17
      %s180 = smul.u32 8, %s18
      %p181 = scmp.lt.s32.totalorder %s180, 7
      %s182 = scalar_select %p181, %s180, 7
      %s183 = smul.addr %s182, 8
      %s184 = scalar_lea.vmem %s1, %s183
      %s185 = smul.u32 8, %s18
      %s186 = smul.u32 4, %s17
      %p187 = scmp.lt.s32.totalorder %s186, 7
      %s188 = scalar_select %p187, %s186, 7
      %s189 = smul.addr %s188, 8
      %s190 = scalar_lea.vmem %s2, %s189
      %s191 = smul.u32 4, %s17
      %p192 = scmp.eq.s32.totalorder %s18, 0
      // Predicated region
      $region29: #{gnn_layer.4} parent=27 // pred_check
        %p193 = pneg %p192
      $region30: #{gnn_layer.4} parent=27 // pred_check_branch
        %195 = sbr.rel (%p193) target = $region32
      $region31: #{gnn_layer.4} parent=27 // pred_region
        %vm196 = vcmask 261120
        %197 = vst.msk [vmem:[#allocation2] sm:$0xff] %vm196, 0.0
        %198 = vst.msk [vmem:[#allocation2 + $0x8] sm:$0xff] %vm196, 0.0
        %199 = vst.msk [vmem:[#allocation2 + $0x10] sm:$0xff] %vm196, 0.0
        %200 = vst.msk [vmem:[#allocation2 + $0x18] sm:$0xff] %vm196, 0.0
      $region32: #{gnn_layer.4} parent=27 // pred_fallthru
        _
      %v201 = vld [vmem:[#allocation2] sm:$0xff]
      %v202 = vld [vmem:[#allocation2 + $0x8] sm:$0xff]
      %v203 = vld [vmem:[#allocation2 + $0x10] sm:$0xff]
      %v204 = vld [vmem:[#allocation2 + $0x18] sm:$0xff]
      %v205 = vld [vmem:[%s178] sm:$0xff]
      %v206 = vld [vmem:[%s178 + $0x8] sm:$0xff]
      %v207 = vld [vmem:[%s178 + $0x10] sm:$0xff]
      %v208 = vld [vmem:[%s178 + $0x18] sm:$0xff]
      %v209 = vld [vmem:[%s184] sm:$0xff]
      %v210 = vld [vmem:[%s184 + $0x8] sm:$0xff]
      %v211 = vld [vmem:[%s184 + $0x10] sm:$0xff]
      %v212 = vld [vmem:[%s184 + $0x18] sm:$0xff]
      %v213 = vld [vmem:[%s184 + $0x20] sm:$0xff]
      %v214 = vld [vmem:[%s184 + $0x28] sm:$0xff]
      %v215 = vld [vmem:[%s184 + $0x30] sm:$0xff]
      %v216 = vld [vmem:[%s184 + $0x38] sm:$0xff]
      %vm217 = vcmask 523264
      %v219 = vsel %vm217, %v205, 0
      %v222 = vsel %vm217, %v206, 0
      %v225 = vsel %vm217, %v207, 0
      %v228 = vsel %vm217, %v208, 0
      %230 = vmatprep.subr.mxu0 0.0
      %231 = vmatpush1.msra.mxu0 %v209
      %232 = vmatprep.subr.mxu0 0.0
      %233 = vmatpush1.msra.mxu0 %v210
      %234 = vmatprep.subr.mxu0 0.0
      %235 = vmatpush1.msra.mxu0 %v211
      %236 = vmatprep.subr.mxu0 0.0
      %237 = vmatpush1.msra.mxu0 %v212
      %238 = vmatprep.subr.mxu0 0.0
      %239 = vmatpush1.msra.mxu0 %v213
      %240 = vmatprep.subr.mxu0 0.0
      %241 = vmatpush1.msra.mxu0 %v214
      %242 = vmatprep.subr.mxu0 0.0
      %243 = vmatpush1.msra.mxu0 %v215
      %244 = vmatprep.subr.mxu0 0.0
      %245 = vmatpush1.msra.mxu0 %v216
      %246 = vmatprep.subr.mxu0 0.0
      %247 = vmatpush1.msra.mxu0 0.0
      %248 = vmatprep.subr.mxu0 0.0
      %249 = vmatpush1.msra.mxu0 0.0
      %250 = vmatprep.subr.mxu0 0.0
      %251 = vmatpush1.msra.mxu0 0.0
      %252 = vmatprep.subr.mxu0 0.0
      %253 = vmatpush1.msra.mxu0 0.0
      %254 = vmatprep.subr.mxu0 0.0
      %255 = vmatpush1.msra.mxu0 0.0
      %256 = vmatprep.subr.mxu0 0.0
      %257 = vmatpush1.msra.mxu0 0.0
      %258 = vmatprep.subr.mxu0 0.0
      %259 = vmatpush1.msra.mxu0 0.0
      %260 = vmatprep.subr.mxu0 0.0
      %261 = vmatpush1.msra.mxu0 0.0
      %262 = vmatprep.subr.mxu0 0.0
      %263 = vmatpush1.msra.mxu0 0.0
      %264 = vmatprep.subr.mxu0 0.0
      %265 = vmatpush1.msra.mxu0 0.0
      %266 = vmatprep.subr.mxu0 0.0
      %267 = vmatpush1.msra.mxu0 0.0
      %268 = vmatprep.subr.mxu0 0.0
      %269 = vmatpush1.msra.mxu0 0.0
      %270 = vmatprep.subr.mxu0 0.0
      %271 = vmatpush1.msra.mxu0 0.0
      %272 = vmatprep.subr.mxu0 0.0
      %273 = vmatpush1.msra.mxu0 0.0
      %274 = vmatprep.subr.mxu0 0.0
      %275 = vmatpush1.msra.mxu0 0.0
      %276 = vmatprep.subr.mxu0 0.0
      %277 = vmatpush1.msra.mxu0 0.0
      %278 = vmatprep.subr.mxu0 0.0
      %279 = vmatpush1.msra.mxu0 0.0
      %280 = vmatprep.subr.mxu0 0.0
      %281 = vmatpush1.msra.mxu0 0.0
      %282 = vmatprep.subr.mxu0 0.0
      %283 = vmatpush1.msra.mxu0 0.0
      %284 = vmatprep.subr.mxu0 0.0
      %285 = vmatpush1.msra.mxu0 0.0
      %286 = vmatprep.subr.mxu0 0.0
      %287 = vmatpush1.msra.mxu0 0.0
      %288 = vmatprep.subr.mxu0 0.0
      %289 = vmatpush1.msra.mxu0 0.0
      %290 = vmatprep.subr.mxu0 0.0
      %291 = vmatpush1.msra.mxu0 0.0
      %292 = vmatprep.subr.mxu0 0.0
      %293 = vmatpush1.msra.mxu0 0.0
      %294 = vmatprep.mubr.f32.mxu0 0.0
      %295 = vmatmul.mubr.f32.gmra.mrb[0].mxu0 %v219
      %v296 = vpop.f32.mrb[0].mxu0
      %v297 = vadd.f32 0.0, %v296
      %v298 = vpop.f32.mrb[0].mxu0
      %299 = vmatprep.mubr.f32.mxu0 0.0
      %300 = vmatmul.mubr.f32.gmra.mrb[0].mxu0 %v222
      %v301 = vpop.f32.mrb[0].mxu0
      %v302 = vadd.f32 0.0, %v301
      %v303 = vpop.f32.mrb[0].mxu0
      %304 = vmatprep.mubr.f32.mxu0 0.0
      %305 = vmatmul.mubr.f32.gmra.mrb[0].mxu0 %v225
      %v306 = vpop.f32.mrb[0].mxu0
      %v307 = vadd.f32 0.0, %v306
      %v308 = vpop.f32.mrb[0].mxu0
      %309 = vmatprep.mubr.f32.mxu0 0.0
      %310 = vmatmul.mubr.f32.gmra.mrb[0].mxu0 %v228
      %v311 = vpop.f32.mrb[0].mxu0
      %v312 = vadd.f32 0.0, %v311
      %v313 = vpop.f32.mrb[0].mxu0
      %314 = vdwg.mxu0
      %v315 = vadd.f32 %v201, %v297
      %v316 = vadd.f32 %v202, %v302
      %v317 = vadd.f32 %v203, %v307
      %v318 = vadd.f32 %v204, %v312
      %vm319 = vcmask 261120
      %320 = vst.msk [vmem:[#allocation2] sm:$0xff] %vm319, %v315
      %321 = vst.msk [vmem:[#allocation2 + $0x8] sm:$0xff] %vm319, %v316
      %322 = vst.msk [vmem:[#allocation2 + $0x10] sm:$0xff] %vm319, %v317
      %323 = vst.msk [vmem:[#allocation2 + $0x18] sm:$0xff] %vm319, %v318
      // Predicated region
      $region33: #{gnn_layer.4} parent=27 // pred_check
        %p324 = pneg %p192
      $region34: #{gnn_layer.4} parent=27 // pred_check_branch
        %326 = sbr.rel (%p324) target = $region36
      $region35: #{gnn_layer.4} parent=27 // pred_region
        %v327 = vld [vmem:[#allocation2] sm:$0xff]
        %v328 = vld [vmem:[#allocation2 + $0x8] sm:$0xff]
        %v329 = vld [vmem:[#allocation2 + $0x10] sm:$0xff]
        %v330 = vld [vmem:[#allocation2 + $0x18] sm:$0xff]
        %331 = vst.msk [vmem:[%s190] sm:$0xff] %vm319, %v327
        %332 = vst.msk [vmem:[%s190 + $0x8] sm:$0xff] %vm319, %v328
        %333 = vst.msk [vmem:[%s190 + $0x10] sm:$0xff] %vm319, %v329
        %334 = vst.msk [vmem:[%s190 + $0x18] sm:$0xff] %vm319, %v330
      $region36: #{gnn_layer.4} parent=27 // pred_fallthru
        _
      %s335 = smul.u32 4, %s17
      %p336 = scmp.lt.s32.totalorder %s335, 7
      %s337 = scalar_select %p336, %s335, 7
      %s338 = smul.addr %s337, 8
      %s339 = scalar_lea.vmem %s2, %s338
      // Predicated region
      $region37: #{gnn_layer.4} parent=27 // pred_check
        %p340 = pneg %p97
      $region38: #{gnn_layer.4} parent=27 // pred_check_branch
        %342 = sbr.rel (%p340) target = $region40
      $region39: #{gnn_layer.4} parent=27 // pred_region
        %s343 = smul.u32 4, %s17
      $region40: #{gnn_layer.4} parent=27 // pred_fallthru
        _
    $region28: #{gnn_layer.4} parent=5 // pred_fallthru
      _
    %p344 = scmp.le.s32.totalorder 2, %s8
    // Predicated region
    $region41: #{gnn_layer.4} parent=5 // pred_check
      %p345 = pneg %p344
    $region42: #{gnn_layer.4} parent=5 // pred_check_branch
      %347 = sbr.rel (%p345) target = $region44
    $region43: #{gnn_layer.4} parent=5 // pred_region
      %s348 = ssub.s32 %s8, 2
      // Predicated region
      $region45: #{gnn_layer.4} parent=43 // pred_check
        %p349 = pneg %p103
      $region46: #{gnn_layer.4} parent=43 // pred_check_branch
        %351 = sbr.rel (%p349) target = $region48
      $region47: #{gnn_layer.4} parent=43 // pred_region
        %s352 = smul.u32 4, %s19
        %p353 = scmp.lt.s32.totalorder %s352, 7
        %s354 = scalar_select %p353, %s352, 7
        %s355 = smul.addr %s354, 8
        %s356 = scalar_lea.vmem %s2, %s355
      $region48: #{gnn_layer.4} parent=43 // pred_fallthru
        _
    $region44: #{gnn_layer.4} parent=5 // pred_fallthru
      _
  $region6: #{gnn_layer.4} parent=0 // loop_footer
    %s12 = sadd.s32 1, %s8
  $region7: #{gnn_layer.4} parent=0 // loop_footer_branch
    %7 = sbr.rel target = $region3
  $region8: #{gnn_layer.4} parent=0 // loop_exit
    _

// kernel: gnn_layer.3
$region0: #{gnn_layer.3}
  #allocation0 [shape = 'u32[]', space=smem, size = 0x4, offset = 0x4, fixed_abs, tag = 'smem constant byte address 0x4 - core index']
  #allocation1 [shape = 'u32[144,128]{1,0:T(1,128)}', space=vmem, size = 0x12000, scoped, tag = 'internal scratch']
  %s0 = inlined_call_operand.vmem [shape: f32[64,32], index: 0, kind: input, shape index: {}]
  %s1 = inlined_call_operand.vmem [shape: f32[32,32], index: 1, kind: input, shape index: {}]
  %s2 = inlined_call_operand.vmem [shape: f32[64,32], index: 2, kind: output, shape index: {}]
  %s3 = sld [smem:[#allocation0]]
  $region41: #{gnn_layer.3} parent=0
    _
  %s5 = ssub.s32 1, %s3
  %s6 = scalar_select 0, %s5, %s3
  loop: start=0, step=1, limit=4
  $region2: #{gnn_layer.3} parent=0 // loop_pre_header
    _
  $region3: #{gnn_layer.3} parent=0 // loop_header
    %s8 = sphi 0, %s12
    %p9 = scmp.ge.s32.totalorder %s8, 4
    %s18 = sphi 0, %s20
    %s21 = sphi 0, %s18
    %s22 = sphi 0, %s21
    %s38 = sphi 0, %s22
    %s42 = sphi 0, %s42
    %s44 = sphi 0, %s42
    %s45 = sphi 0, %s44
    %s59 = sphi 0, %s45
    %s65 = sphi 0, %s67
    %s68 = sphi 0, %s65
    %s69 = sphi 0, %s68
    %s85 = sphi 0, %s69
  $region4: #{gnn_layer.3} parent=0 // loop_header_branch
    %11 = sbr.rel (%p9) target = $region8
  $region5: #{gnn_layer.3} parent=0 // loop_body
    %s13 = ssub.s32 %s8, 1
    %s14 = ssub.s32 %s8, 2
    %s15 = sadd.s32 %s8, 1
    %s16 = ssub.s32 %s8, %s15
    %p17 = scmp.eq.s32.totalorder %s16, 0
    %s19 = sadd.s32 %s18, 1
    %s20 = scalar_select %p17, %s18, %s19
    %p23 = pneg %p17
    %p24 = scmp.eq.s32.totalorder %s8, 1
    %p25 = por %p23, %p24
    %p26 = scmp.ne.s32.totalorder %s18, %s21
    %p27 = scmp.eq.s32.totalorder %s8, 0
    %p28 = por %p26, %p27
    %p29 = scmp.ne.s32.totalorder %s18, %s21
    %p30 = scmp.eq.s32.totalorder %s13, 1
    %p31 = por %p29, %p30
    %p32 = scmp.ne.s32.totalorder %s21, %s22
    %p33 = scmp.eq.s32.totalorder %s13, 0
    %p34 = por %p32, %p33
    %p35 = scmp.ne.s32.totalorder %s21, %s22
    %p36 = scmp.eq.s32.totalorder %s14, 1
    %p37 = por %p35, %p36
    %p39 = scmp.ne.s32.totalorder %s22, %s38
    %p40 = scmp.eq.s32.totalorder %s14, 0
    %p41 = por %p39, %p40
    %s43 = sadd.s32 %s42, 1
    %p46 = scmp.eq.s32.totalorder %s8, 1
    %p47 = scmp.ne.s32.totalorder %s42, %s44
    %p48 = scmp.eq.s32.totalorder %s8, 0
    %p49 = por %p47, %p48
    %p50 = scmp.ne.s32.totalorder %s42, %s44
    %p51 = scmp.eq.s32.totalorder %s13, 1
    %p52 = por %p50, %p51
    %p53 = scmp.ne.s32.totalorder %s44, %s45
    %p54 = scmp.eq.s32.totalorder %s13, 0
    %p55 = por %p53, %p54
    %p56 = scmp.ne.s32.totalorder %s44, %s45
    %p57 = scmp.eq.s32.totalorder %s14, 1
    %p58 = por %p56, %p57
    %p60 = scmp.ne.s32.totalorder %s45, %s59
    %p61 = scmp.eq.s32.totalorder %s14, 0
    %p62 = por %p60, %p61
    %s63 = ssub.s32 %s8, %s15
    %p64 = scmp.eq.s32.totalorder %s63, 0
    %s66 = sadd.s32 %s65, 1
    %s67 = scalar_select %p64, %s65, %s66
    %p70 = pneg %p64
    %p71 = scmp.eq.s32.totalorder %s8, 1
    %p72 = por %p70, %p71
    %p73 = scmp.ne.s32.totalorder %s65, %s68
    %p74 = scmp.eq.s32.totalorder %s8, 0
    %p75 = por %p73, %p74
    %p76 = scmp.ne.s32.totalorder %s65, %s68
    %p77 = scmp.eq.s32.totalorder %s13, 1
    %p78 = por %p76, %p77
    %p79 = scmp.ne.s32.totalorder %s68, %s69
    %p80 = scmp.eq.s32.totalorder %s13, 0
    %p81 = por %p79, %p80
    %p82 = scmp.ne.s32.totalorder %s68, %s69
    %p83 = scmp.eq.s32.totalorder %s14, 1
    %p84 = por %p82, %p83
    %p86 = scmp.ne.s32.totalorder %s69, %s85
    %p87 = scmp.eq.s32.totalorder %s14, 0
    %p88 = por %p86, %p87
    %p89 = scmp.le.s32.totalorder 1, %s8
    %p90 = scmp.lt.s32.totalorder %s8, 3
    %p91 = pnand %p89, %p90
    %p92 = pneg %p91
    // Predicated region
    $region9: #{gnn_layer.3} parent=5 // pred_check
      _
    $region10: #{gnn_layer.3} parent=5 // pred_check_branch
      %94 = sbr.rel (%p91) target = $region12
    $region11: #{gnn_layer.3} parent=5 // pred_region
      %s95 = ssub.s32 %s8, 1
      // Predicated region
      $region13: #{gnn_layer.3} parent=11 // pred_check
        %p96 = pneg %p55
      $region14: #{gnn_layer.3} parent=11 // pred_check_branch
        %98 = sbr.rel (%p96) target = $region16
      $region15: #{gnn_layer.3} parent=11 // pred_region
        _
      $region16: #{gnn_layer.3} parent=11 // pred_fallthru
        _
    $region12: #{gnn_layer.3} parent=5 // pred_fallthru
      _
    %p99 = scmp.lt.s32.totalorder %s8, 2
    // Predicated region
    $region17: #{gnn_layer.3} parent=5 // pred_check
      %p100 = pneg %p99
    $region18: #{gnn_layer.3} parent=5 // pred_check_branch
      %102 = sbr.rel (%p100) target = $region20
    $region19: #{gnn_layer.3} parent=5 // pred_region
      // Predicated region
      $region21: #{gnn_layer.3} parent=19 // pred_check
        %p103 = pneg %p28
      $region22: #{gnn_layer.3} parent=19 // pred_check_branch
        %105 = sbr.rel (%p103) target = $region24
      $region23: #{gnn_layer.3} parent=19 // pred_region
        %s106 = smul.u32 4, %s8
        %p107 = scmp.lt.s32.totalorder %s106, 7
        %s108 = scalar_select %p107, %s106, 7
        %s109 = smul.addr %s108, 8
        %s110 = scalar_lea.vmem %s0, %s109
        %s111 = smul.u32 4, %s8
      $region24: #{gnn_layer.3} parent=19 // pred_fallthru
        _
    $region20: #{gnn_layer.3} parent=5 // pred_fallthru
      _
    %p112 = scmp.le.s32.totalorder 1, %s8
    %p113 = scmp.lt.s32.totalorder %s8, 3
    %p114 = pnand %p112, %p113
    %p115 = pneg %p114
    // Predicated region
    $region25: #{gnn_layer.3} parent=5 // pred_check
      _
    $region26: #{gnn_layer.3} parent=5 // pred_check_branch
      %117 = sbr.rel (%p114) target = $region28
    $region27: #{gnn_layer.3} parent=5 // pred_region
      %s118 = ssub.s32 %s8, 1
      %s119 = smul.u32 4, %s13
      %p120 = scmp.lt.s32.totalorder %s119, 7
      %s121 = scalar_select %p120, %s119, 7
      %s122 = smul.addr %s121, 8
      %s123 = scalar_lea.vmem %s0, %s122
      %p124 = pneg %p34
      %p125 = pneg %p31
      %p126 = pneg %p55
      %p127 = pneg %p52
      %p128 = pneg %p81
      %p129 = pneg %p78
      %s130 = smul.u32 4, %s13
      %p131 = scmp.lt.s32.totalorder %s130, 7
      %s132 = scalar_select %p131, %s130, 7
      %s133 = smul.addr %s132, 8
      %s134 = scalar_lea.vmem %s2, %s133
      %s135 = smul.u32 4, %s13
      %p136 = scmp.lt.s32.totalorder %s135, 7
      %s137 = scalar_select %p136, %s135, 7
      %s138 = smul.addr %s137, 8
      %s139 = scalar_lea.vmem %s0, %s138
      %s140 = smul.u32 4, %s13
      %s141 = smul.u32 4, %s13
      %p142 = scmp.lt.s32.totalorder %s141, 7
      %s143 = scalar_select %p142, %s141, 7
      %s144 = smul.addr %s143, 8
      %s145 = scalar_lea.vmem %s2, %s144
      %s146 = smul.u32 4, %s13
      %v147 = vld [vmem:[%s139] sm:$0xff]
      %v148 = vld [vmem:[%s139 + $0x8] sm:$0xff]
      %v149 = vld [vmem:[%s139 + $0x10] sm:$0xff]
      %v150 = vld [vmem:[%s139 + $0x18] sm:$0xff]
      %v151 = vld [vmem:[%s1] sm:$0xff]
      %v152 = vld [vmem:[%s1 + $0x8] sm:$0xff]
      %v153 = vld [vmem:[%s1 + $0x10] sm:$0xff]
      %v154 = vld [vmem:[%s1 + $0x18] sm:$0xff]
      %vm155 = vcmask 261120
      %v157 = vsel %vm155, %v147, 0
      %v160 = vsel %vm155, %v148, 0
      %v163 = vsel %vm155, %v149, 0
      %v166 = vsel %vm155, %v150, 0
      %168 = vmatprep.subr.mxu0 0.0
      %169 = vmatpush1.msra.mxu0 %v151
      %170 = vmatprep.subr.mxu0 0.0
      %171 = vmatpush1.msra.mxu0 %v152
      %172 = vmatprep.subr.mxu0 0.0
      %173 = vmatpush1.msra.mxu0 %v153
      %174 = vmatprep.subr.mxu0 0.0
      %175 = vmatpush1.msra.mxu0 %v154
      %176 = vmatprep.subr.mxu0 0.0
      %177 = vmatpush1.msra.mxu0 0.0
      %178 = vmatprep.subr.mxu0 0.0
      %179 = vmatpush1.msra.mxu0 0.0
      %180 = vmatprep.subr.mxu0 0.0
      %181 = vmatpush1.msra.mxu0 0.0
      %182 = vmatprep.subr.mxu0 0.0
      %183 = vmatpush1.msra.mxu0 0.0
      %184 = vmatprep.subr.mxu0 0.0
      %185 = vmatpush1.msra.mxu0 0.0
      %186 = vmatprep.subr.mxu0 0.0
      %187 = vmatpush1.msra.mxu0 0.0
      %188 = vmatprep.subr.mxu0 0.0
      %189 = vmatpush1.msra.mxu0 0.0
      %190 = vmatprep.subr.mxu0 0.0
      %191 = vmatpush1.msra.mxu0 0.0
      %192 = vmatprep.subr.mxu0 0.0
      %193 = vmatpush1.msra.mxu0 0.0
      %194 = vmatprep.subr.mxu0 0.0
      %195 = vmatpush1.msra.mxu0 0.0
      %196 = vmatprep.subr.mxu0 0.0
      %197 = vmatpush1.msra.mxu0 0.0
      %198 = vmatprep.subr.mxu0 0.0
      %199 = vmatpush1.msra.mxu0 0.0
      %200 = vmatprep.subr.mxu0 0.0
      %201 = vmatpush1.msra.mxu0 0.0
      %202 = vmatprep.subr.mxu0 0.0
      %203 = vmatpush1.msra.mxu0 0.0
      %204 = vmatprep.subr.mxu0 0.0
      %205 = vmatpush1.msra.mxu0 0.0
      %206 = vmatprep.subr.mxu0 0.0
      %207 = vmatpush1.msra.mxu0 0.0
      %208 = vmatprep.subr.mxu0 0.0
      %209 = vmatpush1.msra.mxu0 0.0
      %210 = vmatprep.subr.mxu0 0.0
      %211 = vmatpush1.msra.mxu0 0.0
      %212 = vmatprep.subr.mxu0 0.0
      %213 = vmatpush1.msra.mxu0 0.0
      %214 = vmatprep.subr.mxu0 0.0
      %215 = vmatpush1.msra.mxu0 0.0
      %216 = vmatprep.subr.mxu0 0.0
      %217 = vmatpush1.msra.mxu0 0.0
      %218 = vmatprep.subr.mxu0 0.0
      %219 = vmatpush1.msra.mxu0 0.0
      %220 = vmatprep.subr.mxu0 0.0
      %221 = vmatpush1.msra.mxu0 0.0
      %222 = vmatprep.subr.mxu0 0.0
      %223 = vmatpush1.msra.mxu0 0.0
      %224 = vmatprep.subr.mxu0 0.0
      %225 = vmatpush1.msra.mxu0 0.0
      %226 = vmatprep.subr.mxu0 0.0
      %227 = vmatpush1.msra.mxu0 0.0
      %228 = vmatprep.subr.mxu0 0.0
      %229 = vmatpush1.msra.mxu0 0.0
      %230 = vmatprep.subr.mxu0 0.0
      %231 = vmatpush1.msra.mxu0 0.0
      %232 = vmatprep.mubr.f32.mxu0 0.0
      %233 = vmatmul.mubr.f32.gmra.mrb[0].mxu0 %v157
      %v234 = vpop.f32.mrb[0].mxu0
      %v235 = vadd.f32 0.0, %v234
      %v236 = vpop.f32.mrb[0].mxu0
      %237 = vmatprep.mubr.f32.mxu0 0.0
      %238 = vmatmul.mubr.f32.gmra.mrb[0].mxu0 %v160
      %v239 = vpop.f32.mrb[0].mxu0
      %v240 = vadd.f32 0.0, %v239
      %v241 = vpop.f32.mrb[0].mxu0
      %242 = vmatprep.mubr.f32.mxu0 0.0
      %243 = vmatmul.mubr.f32.gmra.mrb[0].mxu0 %v163
      %v244 = vpop.f32.mrb[0].mxu0
      %v245 = vadd.f32 0.0, %v244
      %v246 = vpop.f32.mrb[0].mxu0
      %247 = vmatprep.mubr.f32.mxu0 0.0
      %248 = vmatmul.mubr.f32.gmra.mrb[0].mxu0 %v166
      %v249 = vpop.f32.mrb[0].mxu0
      %v250 = vadd.f32 0.0, %v249
      %v251 = vpop.f32.mrb[0].mxu0
      %252 = vdwg.mxu0
      %v253 = vtanh.pop %v235
      %v254 = vtanh.pop %v240
      %v255 = vtanh.pop %v245
      %v256 = vtanh.pop %v250
      %257 = vst.msk [vmem:[%s145] sm:$0xff] %vm155, %v253
      %258 = vst.msk [vmem:[%s145 + $0x8] sm:$0xff] %vm155, %v254
      %259 = vst.msk [vmem:[%s145 + $0x10] sm:$0xff] %vm155, %v255
      %260 = vst.msk [vmem:[%s145 + $0x18] sm:$0xff] %vm155, %v256
      %s261 = smul.u32 4, %s13
      %p262 = scmp.lt.s32.totalorder %s261, 7
      %s263 = scalar_select %p262, %s261, 7
      %s264 = smul.addr %s263, 8
      %s265 = scalar_lea.vmem %s2, %s264
      // Predicated region
      $region29: #{gnn_layer.3} parent=27 // pred_check
        %p266 = pneg %p78
      $region30: #{gnn_layer.3} parent=27 // pred_check_branch
        %268 = sbr.rel (%p266) target = $region32
      $region31: #{gnn_layer.3} parent=27 // pred_region
        %s269 = smul.u32 4, %s13
      $region32: #{gnn_layer.3} parent=27 // pred_fallthru
        _
    $region28: #{gnn_layer.3} parent=5 // pred_fallthru
      _
    %p270 = scmp.le.s32.totalorder 2, %s8
    // Predicated region
    $region33: #{gnn_layer.3} parent=5 // pred_check
      %p271 = pneg %p270
    $region34: #{gnn_layer.3} parent=5 // pred_check_branch
      %273 = sbr.rel (%p271) target = $region36
    $region35: #{gnn_layer.3} parent=5 // pred_region
      %s274 = ssub.s32 %s8, 2
      // Predicated region
      $region37: #{gnn_layer.3} parent=35 // pred_check
        %p275 = pneg %p84
      $region38: #{gnn_layer.3} parent=35 // pred_check_branch
        %277 = sbr.rel (%p275) target = $region40
      $region39: #{gnn_layer.3} parent=35 // pred_region
        %s278 = smul.u32 4, %s14
        %p279 = scmp.lt.s32.totalorder %s278, 7
        %s280 = scalar_select %p279, %s278, 7
        %s281 = smul.addr %s280, 8
        %s282 = scalar_lea.vmem %s2, %s281
      $region40: #{gnn_layer.3} parent=35 // pred_fallthru
        _
    $region36: #{gnn_layer.3} parent=5 // pred_fallthru
      _
  $region6: #{gnn_layer.3} parent=0 // loop_footer
    %s12 = sadd.s32 1, %s8
  $region7: #{gnn_layer.3} parent=0 // loop_footer_branch
    %7 = sbr.rel target = $region3
  $region8: #{gnn_layer.3} parent=0 // loop_exit
    _

// kernel: gnn_layer.5
$region0: #{gnn_layer.5}
  #allocation0 [shape = 'u32[]', space=smem, size = 0x4, offset = 0x4, fixed_abs, tag = 'smem constant byte address 0x4 - core index']
  #allocation1 [shape = 'u32[144,128]{1,0:T(1,128)}', space=vmem, size = 0x12000, scoped, tag = 'internal scratch']
  %s0 = inlined_call_operand.vmem [shape: f32[64,32], index: 0, kind: input, shape index: {}, may-alias: {0,1}]
  %s1 = inlined_call_operand.vmem [shape: f32[64,32], index: 1, kind: input, shape index: {}, may-alias: {0,1}]
  %s2 = inlined_call_operand.hbm [shape: f32[64,64], index: 2, kind: output, shape index: {}]
  %s3 = sld [smem:[#allocation0]]
  $region41: #{gnn_layer.5} parent=0
    _
  %s5 = ssub.s32 1, %s3
  %s6 = scalar_select 0, %s5, %s3
  $region1: #{gnn_layer.5} parent=0
    #allocation2 [shape = 'u8[32768]{0}', space=vmem, size = 0x8000, scoped, tag = 'output window, operand 0']
    #allocation3 [shape = 's32[2]{0}', space=sflag, size = 0x8, scoped, tag = 'scoped memory for gnn_layer.5']
    %7 = vsyncpa [#allocation3], 0
    %s8 = scalar_lea.sflag [#allocation3], 1
    %9 = vsyncpa %s8, 0
    loop: start=0, step=1, limit=4
    $region2: #{gnn_layer.5} parent=1 // loop_pre_header
      _
    $region3: #{gnn_layer.5} parent=1 // loop_header
      %s11 = sphi 0, %s15
      %p12 = scmp.ge.s32.totalorder %s11, 4
      %s18 = sphi 0, %s30
      %s19 = sphi 0, %s26
      %s20 = sphi 0, %s18
      %s21 = sphi 0, %s19
      %s22 = sphi 0, %s20
      %s23 = sphi 0, %s21
      %s33 = sphi 0, %s35
      %s36 = sphi 0, %s33
      %s37 = sphi 0, %s36
      %s53 = sphi 0, %s37
      %s59 = sphi 0, %s61
      %s62 = sphi 0, %s59
      %s63 = sphi 0, %s62
      %s79 = sphi 0, %s63
      %s87 = sphi 0, %s89
      %s90 = sphi 0, %s87
      %s91 = sphi 0, %s90
      %s107 = sphi 0, %s91
    $region4: #{gnn_layer.5} parent=1 // loop_header_branch
      %14 = sbr.rel (%p12) target = $region8
    $region5: #{gnn_layer.5} parent=1 // loop_body
      %s16 = ssub.s32 %s11, 1
      %s17 = ssub.s32 %s11, 2
      %s24 = sadd.s32 1, %s19
      %p25 = scmp.ge.s32.totalorder %s24, 1
      %s26 = scalar_select %p25, 0, %s24
      %s27 = sadd.s32 1, %s18
      %s28 = scalar_select %p25, %s27, %s18
      %p29 = scmp.ge.s32.totalorder %s28, 2
      %s30 = scalar_select %p29, 0, %s28
      %s31 = ssub.s32 %s18, %s30
      %p32 = scmp.eq.s32.totalorder %s31, 0
      %s34 = sadd.s32 %s33, 1
      %s35 = scalar_select %p32, %s33, %s34
      %p38 = pneg %p32
      %p39 = scmp.eq.s32.totalorder %s11, 1
      %p40 = por %p38, %p39
      %p41 = scmp.ne.s32.totalorder %s33, %s36
      %p42 = scmp.eq.s32.totalorder %s11, 0
      %p43 = por %p41, %p42
      %p44 = scmp.ne.s32.totalorder %s33, %s36
      %p45 = scmp.eq.s32.totalorder %s16, 1
      %p46 = por %p44, %p45
      %p47 = scmp.ne.s32.totalorder %s36, %s37
      %p48 = scmp.eq.s32.totalorder %s16, 0
      %p49 = por %p47, %p48
      %p50 = scmp.ne.s32.totalorder %s36, %s37
      %p51 = scmp.eq.s32.totalorder %s17, 1
      %p52 = por %p50, %p51
      %p54 = scmp.ne.s32.totalorder %s37, %s53
      %p55 = scmp.eq.s32.totalorder %s17, 0
      %p56 = por %p54, %p55
      %s57 = ssub.s32 %s19, %s26
      %p58 = scmp.eq.s32.totalorder %s57, 0
      %s60 = sadd.s32 %s59, 1
      %s61 = scalar_select %p58, %s59, %s60
      %p64 = pneg %p58
      %p65 = scmp.eq.s32.totalorder %s11, 1
      %p66 = por %p64, %p65
      %p67 = scmp.ne.s32.totalorder %s59, %s62
      %p68 = scmp.eq.s32.totalorder %s11, 0
      %p69 = por %p67, %p68
      %p70 = scmp.ne.s32.totalorder %s59, %s62
      %p71 = scmp.eq.s32.totalorder %s16, 1
      %p72 = por %p70, %p71
      %p73 = scmp.ne.s32.totalorder %s62, %s63
      %p74 = scmp.eq.s32.totalorder %s16, 0
      %p75 = por %p73, %p74
      %p76 = scmp.ne.s32.totalorder %s62, %s63
      %p77 = scmp.eq.s32.totalorder %s17, 1
      %p78 = por %p76, %p77
      %p80 = scmp.ne.s32.totalorder %s63, %s79
      %p81 = scmp.eq.s32.totalorder %s17, 0
      %p82 = por %p80, %p81
      %s83 = ssub.s32 %s18, %s30
      %s84 = ssub.s32 %s19, %s26
      %s85 = sor.u32 %s83, %s84
      %p86 = scmp.eq.s32.totalorder %s85, 0
      %s88 = sadd.s32 %s87, 1
      %s89 = scalar_select %p86, %s87, %s88
      %p92 = pneg %p86
      %p93 = scmp.eq.s32.totalorder %s11, 1
      %p94 = por %p92, %p93
      %p95 = scmp.ne.s32.totalorder %s87, %s90
      %p96 = scmp.eq.s32.totalorder %s11, 0
      %p97 = por %p95, %p96
      %p98 = scmp.ne.s32.totalorder %s87, %s90
      %p99 = scmp.eq.s32.totalorder %s16, 1
      %p100 = por %p98, %p99
      %p101 = scmp.ne.s32.totalorder %s90, %s91
      %p102 = scmp.eq.s32.totalorder %s16, 0
      %p103 = por %p101, %p102
      %p104 = scmp.ne.s32.totalorder %s90, %s91
      %p105 = scmp.eq.s32.totalorder %s17, 1
      %p106 = por %p104, %p105
      %p108 = scmp.ne.s32.totalorder %s91, %s107
      %p109 = scmp.eq.s32.totalorder %s17, 0
      %p110 = por %p108, %p109
      %p111 = scmp.le.s32.totalorder 1, %s11
      %p112 = scmp.lt.s32.totalorder %s11, 3
      %p113 = pnand %p111, %p112
      %p114 = pneg %p113
      // Predicated region
      $region9: #{gnn_layer.5} parent=5 // pred_check
        _
      $region10: #{gnn_layer.5} parent=5 // pred_check_branch
        %116 = sbr.rel (%p113) target = $region12
      $region11: #{gnn_layer.5} parent=5 // pred_region
        %s117 = ssub.s32 %s11, 1
        // Predicated region
        $region13: #{gnn_layer.5} parent=11 // pred_check
          %p118 = pneg %p75
        $region14: #{gnn_layer.5} parent=11 // pred_check_branch
          %120 = sbr.rel (%p118) target = $region16
        $region15: #{gnn_layer.5} parent=11 // pred_region
          %s121 = smul.u32 8, %s21
          %p122 = scmp.lt.s32.totalorder %s121, 7
          %s123 = scalar_select %p122, %s121, 7
          %s124 = smul.addr %s123, 8
          %s125 = scalar_lea.vmem %s1, %s124
          %s126 = smul.u32 8, %s21
        $region16: #{gnn_layer.5} parent=11 // pred_fallthru
          _
      $region12: #{gnn_layer.5} parent=5 // pred_fallthru
        _
      %p127 = scmp.lt.s32.totalorder %s11, 2
      // Predicated region
      $region17: #{gnn_layer.5} parent=5 // pred_check
        %p128 = pneg %p127
      $region18: #{gnn_layer.5} parent=5 // pred_check_branch
        %130 = sbr.rel (%p128) target = $region20
      $region19: #{gnn_layer.5} parent=5 // pred_region
        // Predicated region
        $region21: #{gnn_layer.5} parent=19 // pred_check
          %p131 = pneg %p43
        $region22: #{gnn_layer.5} parent=19 // pred_check_branch
          %133 = sbr.rel (%p131) target = $region24
        $region23: #{gnn_layer.5} parent=19 // pred_region
          %s134 = smul.u32 4, %s18
          %p135 = scmp.lt.s32.totalorder %s134, 7
          %s136 = scalar_select %p135, %s134, 7
          %s137 = smul.addr %s136, 8
          %s138 = scalar_lea.vmem %s0, %s137
          %s139 = smul.u32 4, %s18
        $region24: #{gnn_layer.5} parent=19 // pred_fallthru
          _
      $region20: #{gnn_layer.5} parent=5 // pred_fallthru
        _
      %p140 = scmp.le.s32.totalorder 1, %s11
      %p141 = scmp.lt.s32.totalorder %s11, 3
      %p142 = pnand %p140, %p141
      %p143 = pneg %p142
      // Predicated region
      $region25: #{gnn_layer.5} parent=5 // pred_check
        _
      $region26: #{gnn_layer.5} parent=5 // pred_check_branch
        %145 = sbr.rel (%p142) target = $region28
      $region27: #{gnn_layer.5} parent=5 // pred_region
        %s146 = ssub.s32 %s11, 1
        %s147 = smul.u32 4, %s20
        %p148 = scmp.lt.s32.totalorder %s147, 7
        %s149 = scalar_select %p148, %s147, 7
        %s150 = smul.addr %s149, 8
        %s151 = scalar_lea.vmem %s0, %s150
        %p152 = pneg %p49
        %p153 = pneg %p46
        %s154 = smul.u32 8, %s21
        %p155 = scmp.lt.s32.totalorder %s154, 7
        %s156 = scalar_select %p155, %s154, 7
        %s157 = smul.addr %s156, 8
        %s158 = scalar_lea.vmem %s1, %s157
        %p159 = pneg %p75
        %p160 = pneg %p72
        %p161 = pneg %p103
        %p162 = pneg %p100
        %s163 = sand.u32 %s90, 1
        %s164 = scalar_lea.sflag [#allocation3], %s163
        %s165 = sand.u32 %s90, 1
        %s166 = smul.addr %s165, 32
        %s167 = scalar_lea.vmem [#allocation2], %s166
        %s168 = smul.u32 4, %s20
        %p169 = scmp.lt.s32.totalorder %s168, 7
        %s170 = scalar_select %p169, %s168, 7
        %s171 = smul.addr %s170, 8
        %s172 = scalar_lea.vmem %s0, %s171
        %s173 = smul.u32 4, %s20
        %s174 = smul.u32 8, %s21
        %p175 = scmp.lt.s32.totalorder %s174, 7
        %s176 = scalar_select %p175, %s174, 7
        %s177 = smul.addr %s176, 8
        %s178 = scalar_lea.vmem %s1, %s177
        %s179 = smul.u32 8, %s21
        %s180 = smul.u32 4, %s20
        %v181 = vld [vmem:[%s172] sm:$0xff]
        %v182 = vld [vmem:[%s172 + $0x8] sm:$0xff]
        %v183 = vld [vmem:[%s172 + $0x10] sm:$0xff]
        %v184 = vld [vmem:[%s172 + $0x18] sm:$0xff]
        %v185 = vld [vmem:[%s178] sm:$0xff]
        %v186 = vld [vmem:[%s178 + $0x8] sm:$0xff]
        %v187 = vld [vmem:[%s178 + $0x10] sm:$0xff]
        %v188 = vld [vmem:[%s178 + $0x18] sm:$0xff]
        %v189 = vld [vmem:[%s178 + $0x20] sm:$0xff]
        %v190 = vld [vmem:[%s178 + $0x28] sm:$0xff]
        %v191 = vld [vmem:[%s178 + $0x30] sm:$0xff]
        %v192 = vld [vmem:[%s178 + $0x38] sm:$0xff]
        %vm193 = vcmask 261120
        %v195 = vsel %vm193, %v181, 0
        %v198 = vsel %vm193, %v182, 0
        %v201 = vsel %vm193, %v183, 0
        %v204 = vsel %vm193, %v184, 0
        %v207 = vsel %vm193, %v185, 0
        %v210 = vsel %vm193, %v186, 0
        %v213 = vsel %vm193, %v187, 0
        %v216 = vsel %vm193, %v188, 0
        %v219 = vsel %vm193, %v189, 0
        %v222 = vsel %vm193, %v190, 0
        %v225 = vsel %vm193, %v191, 0
        %v228 = vsel %vm193, %v192, 0
        %230 = vmatprep.subr.mxu0 0.0
        %231 = vmatpush1.xpose.msra.mxu0 %v207
        %232 = vmatprep.subr.mxu0 0.0
        %233 = vmatpush1.xpose.msra.mxu0 %v210
        %234 = vmatprep.subr.mxu0 0.0
        %235 = vmatpush1.xpose.msra.mxu0 %v213
        %236 = vmatprep.subr.mxu0 0.0
        %237 = vmatpush1.xpose.msra.mxu0 %v216
        %238 = vmatprep.subr.mxu0 0.0
        %239 = vmatpush1.xpose.msra.mxu0 %v219
        %240 = vmatprep.subr.mxu0 0.0
        %241 = vmatpush1.xpose.msra.mxu0 %v222
        %242 = vmatprep.subr.mxu0 0.0
        %243 = vmatpush1.xpose.msra.mxu0 %v225
        %244 = vmatprep.subr.mxu0 0.0
        %245 = vmatpush1.xpose.msra.mxu0 %v228
        %246 = vmatprep.subr.mxu0 0.0
        %247 = vmatpush1.xpose.msra.mxu0 0.0
        %248 = vmatprep.subr.mxu0 0.0
        %249 = vmatpush1.xpose.msra.mxu0 0.0
        %250 = vmatprep.subr.mxu0 0.0
        %251 = vmatpush1.xpose.msra.mxu0 0.0
        %252 = vmatprep.subr.mxu0 0.0
        %253 = vmatpush1.xpose.msra.mxu0 0.0
        %254 = vmatprep.subr.mxu0 0.0
        %255 = vmatpush1.xpose.msra.mxu0 0.0
        %256 = vmatprep.subr.mxu0 0.0
        %257 = vmatpush1.xpose.msra.mxu0 0.0
        %258 = vmatprep.subr.mxu0 0.0
        %259 = vmatpush1.xpose.msra.mxu0 0.0
        %260 = vmatprep.subr.mxu0 0.0
        %261 = vmatpush1.xpose.msra.mxu0 0.0
        %262 = vmatprep.subr.mxu0 0.0
        %263 = vmatpush1.xpose.msra.mxu0 0.0
        %264 = vmatprep.subr.mxu0 0.0
        %265 = vmatpush1.xpose.msra.mxu0 0.0
        %266 = vmatprep.subr.mxu0 0.0
        %267 = vmatpush1.xpose.msra.mxu0 0.0
        %268 = vmatprep.subr.mxu0 0.0
        %269 = vmatpush1.xpose.msra.mxu0 0.0
        %270 = vmatprep.subr.mxu0 0.0
        %271 = vmatpush1.xpose.msra.mxu0 0.0
        %272 = vmatprep.subr.mxu0 0.0
        %273 = vmatpush1.xpose.msra.mxu0 0.0
        %274 = vmatprep.subr.mxu0 0.0
        %275 = vmatpush1.xpose.msra.mxu0 0.0
        %276 = vmatprep.subr.mxu0 0.0
        %277 = vmatpush1.xpose.msra.mxu0 0.0
        %278 = vmatprep.subr.mxu0 0.0
        %279 = vmatpush1.xpose.msra.mxu0 0.0
        %280 = vmatprep.subr.mxu0 0.0
        %281 = vmatpush1.xpose.msra.mxu0 0.0
        %282 = vmatprep.subr.mxu0 0.0
        %283 = vmatpush1.xpose.msra.mxu0 0.0
        %284 = vmatprep.subr.mxu0 0.0
        %285 = vmatpush1.xpose.msra.mxu0 0.0
        %286 = vmatprep.subr.mxu0 0.0
        %287 = vmatpush1.xpose.msra.mxu0 0.0
        %288 = vmatprep.subr.mxu0 0.0
        %289 = vmatpush1.xpose.msra.mxu0 0.0
        %290 = vmatprep.subr.mxu0 0.0
        %291 = vmatpush1.xpose.msra.mxu0 0.0
        %292 = vmatprep.subr.mxu0 0.0
        %293 = vmatpush1.xpose.msra.mxu0 0.0
        %294 = vmatprep.mubr.f32.mxu0 0.0
        %295 = vmatmul.mubr.f32.gmra.mrb[0].mxu0 %v195
        %v296 = vpop.f32.mrb[0].mxu0
        %v297 = vadd.f32 0.0, %v296
        %v298 = vpop.f32.mrb[0].mxu0
        %299 = vmatprep.mubr.f32.mxu0 0.0
        %300 = vmatmul.mubr.f32.gmra.mrb[0].mxu0 %v198
        %v301 = vpop.f32.mrb[0].mxu0
        %v302 = vadd.f32 0.0, %v301
        %v303 = vpop.f32.mrb[0].mxu0
        %304 = vmatprep.mubr.f32.mxu0 0.0
        %305 = vmatmul.mubr.f32.gmra.mrb[0].mxu0 %v201
        %v306 = vpop.f32.mrb[0].mxu0
        %v307 = vadd.f32 0.0, %v306
        %v308 = vpop.f32.mrb[0].mxu0
        %309 = vmatprep.mubr.f32.mxu0 0.0
        %310 = vmatmul.mubr.f32.gmra.mrb[0].mxu0 %v204
        %v311 = vpop.f32.mrb[0].mxu0
        %v312 = vadd.f32 0.0, %v311
        %v313 = vpop.f32.mrb[0].mxu0
        %314 = vdwg.mxu0
        %v315 = vmul.f32 %v297, 0.5
        %v316 = vmul.f32 %v302, 0.5
        %v317 = vmul.f32 %v307, 0.5
        %v318 = vmul.f32 %v312, 0.5
        %v319 = vtanh.pop %v315
        %v320 = vtanh.pop %v316
        %v321 = vtanh.pop %v317
        %v322 = vtanh.pop %v318
        %v323 = vadd.f32 %v319, 1.0
        %v324 = vadd.f32 %v320, 1.0
        %v325 = vadd.f32 %v321, 1.0
        %v326 = vadd.f32 %v322, 1.0
        %v327 = vmul.f32 %v323, 0.5
        %v328 = vmul.f32 %v324, 0.5
        %v329 = vmul.f32 %v325, 0.5
        %v330 = vmul.f32 %v326, 0.5
        %vm331 = vcmask 523264
        %332 = vst.msk [vmem:[%s167] sm:$0xff] %vm331, %v327
        %333 = vst.msk [vmem:[%s167 + $0x8] sm:$0xff] %vm331, %v328
        %334 = vst.msk [vmem:[%s167 + $0x10] sm:$0xff] %vm331, %v329
        %335 = vst.msk [vmem:[%s167 + $0x18] sm:$0xff] %vm331, %v330
        %s336 = sand.u32 %s90, 1
        %s337 = scalar_lea.sflag [#allocation3], %s336
        %s338 = sand.u32 %s90, 1
        %s339 = smul.addr %s338, 32
        %s340 = scalar_lea.vmem [#allocation2], %s339
        // Predicated region
        $region29: #{gnn_layer.5} parent=27 // pred_check
          %p341 = pneg %p100
        $region30: #{gnn_layer.5} parent=27 // pred_check_branch
          %343 = sbr.rel (%p341) target = $region32
        $region31: #{gnn_layer.5} parent=27 // pred_region
          %s344 = smul.u32 4, %s20
          %s346 = ssub.s32 512, 512
          %347 = vsyncadd %s337, %s346
          %s348 = sadd.s32 %s21, %s344
          %s349 = smul.addr %s348, 128
          %s350 = scalar_lea.hbm %s2, %s349
          %s351 = sshll.u32 %s340, 4
          %s352 = int_to_ptr.vmem [resolvable:$true] %s351
          %357 = dma.vmem_to_hbm [thread:$0]  %s352, 512, %s350, %s337, 128, 128, 8
        $region32: #{gnn_layer.5} parent=27 // pred_fallthru
          _
      $region28: #{gnn_layer.5} parent=5 // pred_fallthru
        _
      %p358 = scmp.le.s32.totalorder 2, %s11
      // Predicated region
      $region33: #{gnn_layer.5} parent=5 // pred_check
        %p359 = pneg %p358
      $region34: #{gnn_layer.5} parent=5 // pred_check_branch
        %361 = sbr.rel (%p359) target = $region36
      $region35: #{gnn_layer.5} parent=5 // pred_region
        %s362 = ssub.s32 %s11, 2
        // Predicated region
        $region37: #{gnn_layer.5} parent=35 // pred_check
          %p363 = pneg %p106
        $region38: #{gnn_layer.5} parent=35 // pred_check_branch
          %365 = sbr.rel (%p363) target = $region40
        $region39: #{gnn_layer.5} parent=35 // pred_region
          %s366 = sand.u32 %s91, 1
          %s367 = scalar_lea.sflag [#allocation3], %s366
          %s368 = sand.u32 %s91, 1
          %s369 = smul.addr %s368, 32
          %s370 = scalar_lea.vmem [#allocation2], %s369
          %371 = dma.done %s367, 512
        $region40: #{gnn_layer.5} parent=35 // pred_fallthru
          _
      $region36: #{gnn_layer.5} parent=5 // pred_fallthru
        _
    $region6: #{gnn_layer.5} parent=1 // loop_footer
      %s15 = sadd.s32 1, %s11
    $region7: #{gnn_layer.5} parent=1 // loop_footer_branch
      %10 = sbr.rel target = $region3
    $region8: #{gnn_layer.5} parent=1 // loop_exit
      _
    %372 = vsyncpa [#allocation3], 1
    %s373 = scalar_lea.sflag [#allocation3], 1
    %374 = vsyncpa %s373, 1

</llo_original>
